<compile_context>
chip_gen: v5e
topology: v5e:2x2
jax: 0.10.0
libtpu: 0.0.40
codegen_flags: <defaults>
</compile_context>

<pallas_src>
import functools

import jax
import jax.numpy as jnp
from jax.experimental import pallas as pl
from jax.experimental.pallas import tpu as pltpu

D_PAD = 128            # lane-padded class width
NEG = -1e30            # effectively -inf bias for padded class lanes
_MIB = 1024 * 1024


def _round_up(x, m):
    return (x + m - 1) // m * m


def _largest_tile(size, cap):
    """Largest multiple of 128 that divides `size` (a multiple of 128) and is <= cap."""
    t = max(128, min(cap, size) // 128 * 128)
    while size % t:
        t -= 128
    return t


def _choose_prop_tiles(n_pad):
    """Row tile TM (<=512) and reduction tile TK (<=2048) for the propagations."""
    tk = _largest_tile(n_pad, 2048)
    tm = _largest_tile(n_pad, 512)
    # v7x has 2 TensorCores: keep >= 2 row tiles so the "parallel" row axis can
    # still shard across them (no-op on v5e/v6e).
    if n_pad // tm < 2 and n_pad >= 256:
        tm = _largest_tile(n_pad, n_pad // 2)
    return tm, tk


# ---------------------------------------------------------------------------
# Kernels
# ---------------------------------------------------------------------------
def project_kernel(x_ref, w_ref, o_ref, acc_ref):
    """One (row-tile, k-tile) step of P = X @ W with an f32 VMEM accumulator."""
    k = pl.program_id(1)

    @pl.when(k == 0)
    def _():
        acc_ref[...] = jnp.zeros_like(acc_ref)

    acc_ref[...] += jnp.dot(
        x_ref[...], w_ref[...], preferred_element_type=jnp.float32
    )

    @pl.when(k == pl.num_programs(1) - 1)
    def _():
        o_ref[...] = acc_ref[...].astype(o_ref.dtype)


def propagate_kernel(*refs, finalize, h_resident, tk):
    """One (row-tile, k-tile) step of A_hat @ H with an f32 VMEM accumulator.

    `h_resident=True` means H is the full (n_pad, 128) slab kept in VMEM and is
    sliced in-kernel; otherwise H arrives as a (TK, 128) pipelined tile.
    When `finalize` is True, the last k step adds the bias and applies
    log_softmax over the padded class axis, writing an f32 output tile.
    """
    if finalize:
        a_ref, h_ref, b_ref, o_ref, acc_ref = refs
    else:
        a_ref, h_ref, o_ref, acc_ref = refs

    k = pl.program_id(1)

    @pl.when(k == 0)
    def _():
        acc_ref[...] = jnp.zeros_like(acc_ref)

    if h_resident:
        start = pl.multiple_of(k * tk, 128)
        h = h_ref[pl.ds(start, tk), :]
    else:
        h = h_ref[...]

    acc_ref[...] += jnp.dot(a_ref[...], h, preferred_element_type=jnp.float32)

    @pl.when(k == pl.num_programs(1) - 1)
    def _():
        if finalize:
            logits = acc_ref[...] + b_ref[...]       # f32; padded lanes ~ -1e30
            m = jnp.max(logits, axis=1, keepdims=True)
            shifted = logits - m
            lse = jnp.log(jnp.sum(jnp.exp(shifted), axis=1, keepdims=True))
            o_ref[...] = shifted - lse
        else:
            o_ref[...] = acc_ref[...].astype(o_ref.dtype)


# ---------------------------------------------------------------------------
# Pallas-call wrappers
# ---------------------------------------------------------------------------
def _project(x_bf16, w_bf16, n_pad, d_in_pad, dk):
    tm = _largest_tile(n_pad, 512)
    nk = d_in_pad // dk
    vmem = (2 * tm * dk * 2 + 2 * dk * D_PAD * 2
            + tm * D_PAD * 4 + 2 * tm * D_PAD * 2)
    return pl.pallas_call(
        project_kernel,
        out_shape=jax.ShapeDtypeStruct((n_pad, D_PAD), jnp.bfloat16),
        grid_spec=pltpu.PrefetchScalarGridSpec(
            num_scalar_prefetch=0,
            grid=(n_pad // tm, nk),
            in_specs=[
                pl.BlockSpec((tm, dk), lambda i, k: (i, k)),
                pl.BlockSpec((dk, D_PAD), lambda i, k: (k, 0)),
            ],
            out_specs=pl.BlockSpec((tm, D_PAD), lambda i, k: (i, 0)),
            scratch_shapes=[pltpu.VMEM((tm, D_PAD), jnp.float32)],
        ),
        compiler_params=pltpu.CompilerParams(
            dimension_semantics=("parallel", "arbitrary"),
            vmem_limit_bytes=int(max(16 * _MIB, 2 * vmem)),
        ),
    )(x_bf16, w_bf16)


def _propagate(a_bf16, h_bf16, b_pad, n_pad, *, finalize):
    tm, tk = _choose_prop_tiles(n_pad)
    out_dtype = jnp.float32 if finalize else jnp.bfloat16
    out_bytes = 4 if finalize else 2

    # Keep the whole H slab (n_pad x 128 bf16) resident in VMEM when small
    # enough (budgeted for double-buffering): removes all H re-reads. Safe on
    # v7x's 64 MiB; falls back to (TK, 128) tiles for very large graphs.
    h_full_bytes = n_pad * D_PAD * 2
    h_resident = h_full_bytes <= 8 * _MIB

    kernel = functools.partial(
        propagate_kernel, finalize=finalize, h_resident=h_resident, tk=tk)

    in_specs = [pl.BlockSpec((tm, tk), lambda i, k: (i, k))]
    if h_resident:
        in_specs.append(pl.BlockSpec((n_pad, D_PAD), lambda i, k: (0, 0)))
    else:
        in_specs.append(pl.BlockSpec((tk, D_PAD), lambda i, k: (k, 0)))
    args = [a_bf16, h_bf16]
    if finalize:
        in_specs.append(pl.BlockSpec((1, D_PAD), lambda i, k: (0, 0)))
        args.append(b_pad)

    vmem = (2 * tm * tk * 2                                        # A tiles
            + (2 * h_full_bytes if h_resident else 2 * tk * D_PAD * 2)
            + tm * D_PAD * 4                                       # acc
            + 2 * tm * D_PAD * out_bytes                           # out tiles
            + 2 * D_PAD * 4)                                       # bias
    h_reads = 1 if h_resident else (n_pad // tm)
    cost = pl.CostEstimate(
        flops=2 * n_pad * n_pad * D_PAD,
        transcendentals=(n_pad * D_PAD if finalize else 0),
        bytes_accessed=(n_pad * n_pad * 2
                        + h_reads * n_pad * D_PAD * 2
                        + n_pad * D_PAD * out_bytes),
    )
    return pl.pallas_call(
        kernel,
        out_shape=jax.ShapeDtypeStruct((n_pad, D_PAD), out_dtype),
        grid_spec=pltpu.PrefetchScalarGridSpec(
            num_scalar_prefetch=0,
            grid=(n_pad // tm, n_pad // tk),
            in_specs=in_specs,
            out_specs=pl.BlockSpec((tm, D_PAD), lambda i, k: (i, 0)),
            scratch_shapes=[pltpu.VMEM((tm, D_PAD), jnp.float32)],
        ),
        compiler_params=pltpu.CompilerParams(
            dimension_semantics=("parallel", "arbitrary"),
            vmem_limit_bytes=int(min(48 * _MIB, max(16 * _MIB, 2 * vmem))),
        ),
        cost_estimate=cost,
    )(*args)


def sgc_forward(a_hat, x, w, b):
    """log_softmax(A_hat @ A_hat @ X @ W + b, axis=1) — Pallas hot path."""
    n, d_in = x.shape
    d_out = w.shape[1]
    n_pad = _round_up(max(n, 128), 128)

    # Projection K axis: tiny d_in stays a single full-width block; large d_in
    # is padded to a multiple of 128 and tiled (keeps the project kernel within
    # VMEM for big feature dims).
    if d_in <= 256:
        d_in_pad, dk = d_in, d_in
    else:
        d_in_pad = _round_up(d_in, 128)
        dk = _largest_tile(d_in_pad, 512)

    # Cast to bf16 first (single pass); pad only when actually needed — avoids
    # an extra f32 pad pass + cast pass over the N x N adjacency.
    a_bf16 = a_hat.astype(jnp.bfloat16)
    if n_pad != n:
        a_bf16 = jnp.pad(a_bf16, ((0, n_pad - n), (0, n_pad - n)))
    x_bf16 = x.astype(jnp.bfloat16)
    if n_pad != n or d_in_pad != d_in:
        x_bf16 = jnp.pad(x_bf16, ((0, n_pad - n), (0, d_in_pad - d_in)))
    w_bf16 = jnp.pad(w.astype(jnp.bfloat16),
                     ((0, d_in_pad - d_in), (0, D_PAD - d_out)))
    # Padded classes get a huge negative bias so the in-kernel log_softmax over
    # 128 lanes matches log_softmax over the real d_out classes.
    b_p = jnp.full((1, D_PAD), NEG, jnp.float32).at[:, :d_out].set(b)

    p = _project(x_bf16, w_bf16, n_pad, d_in_pad, dk)           # [n_pad,128] bf16
    h1 = _propagate(a_bf16, p, None, n_pad, finalize=False)     # [n_pad,128] bf16
    out = _propagate(a_bf16, h1, b_p, n_pad, finalize=True)     # [n_pad,128] f32
    return out[:n, :d_out]


# ---------------------------------------------------------------------------
# Graph glue (plain JAX): dense D^{-1/2} (A + I) D^{-1/2}, mirroring gcn_norm.
# ---------------------------------------------------------------------------
def gcn_norm_dense(edge_index, num_nodes):
    """out[i] = sum over edges (j -> i) of norm_ji * x[j]; M[target, source]."""
    row = edge_index[0]
    col = edge_index[1]
    loop = jnp.arange(num_nodes, dtype=row.dtype)
    row = jnp.concatenate([row, loop])
    col = jnp.concatenate([col, loop])
    ew = jnp.ones(row.shape[0], dtype=jnp.float32)
    deg = jnp.zeros((num_nodes,), jnp.float32).at[col].add(ew)
    dinv = jnp.where(deg > 0, 1.0 / jnp.sqrt(deg), 0.0)
    norm = dinv[row] * ew * dinv[col]
    a_hat = jnp.zeros((num_nodes, num_nodes), jnp.float32).at[col, row].add(norm)
    return a_hat


if __name__ == "__main__":
    key = jax.random.PRNGKey(0)
    k_x, k_e, k_w, k_b = jax.random.split(key, 4)

    num_nodes = 256
    input_dim = 32
    output_dim = 8
    num_edges = 1024

    # Node features [N, D_in]
    x = jax.random.normal(k_x, (num_nodes, input_dim), dtype=jnp.float32)

    # Random edge_index [2, E] (directed edges src -> dst)
    edge_index = jax.random.randint(k_e, (2, num_edges), 0, num_nodes, dtype=jnp.int32)

    # SGConv linear parameters (W given as lin.weight transposed: [D_in, D_out])
    limit = 1.0 / jnp.sqrt(jnp.float32(input_dim))
    w = jax.random.uniform(k_w, (input_dim, output_dim), jnp.float32, -limit, limit)
    b = jax.random.uniform(k_b, (1, output_dim), jnp.float32, -limit, limit)

    a_hat = gcn_norm_dense(edge_index, num_nodes)

    out = sgc_forward(a_hat, x, w, b)
    out = jax.block_until_ready(out)

    # Sanity check against a pure-f32 JAX reference (loose tolerance: the
    # Pallas path uses bf16 matmul operands with f32 accumulation).
    logits_ref = a_hat @ (a_hat @ (x @ w)) + b
    ref = jax.nn.log_softmax(logits_ref, axis=1)
    assert out.shape == ref.shape, "shape mismatch vs reference"
    assert jnp.allclose(out, ref, atol=5e-2, rtol=5e-2), "mismatch vs reference"

    print("KERNEL_OK")
</pallas_src>

<mosaic_0001>
module attributes {stable_mosaic.version = 11 : i64} {
  func.func @project_kernel(%arg0: i32, %arg1: i32, %arg2: memref<256x32xbf16, #tpu.memory_space<vmem>>, %arg3: memref<32x128xbf16, #tpu.memory_space<vmem>>, %arg4: memref<256x128xbf16, #tpu.memory_space<vmem>>, %arg5: memref<256x128xf32, #tpu.memory_space<vmem>>) attributes {dimension_semantics = [#tpu.dimension_semantics<parallel>, #tpu.dimension_semantics<arbitrary>], iteration_bounds = array<i64: 1, 1>, scalar_prefetch = 0 : i64, scratch_operands = 1 : i64, tpu.core_type = #tpu.core_type<tc>, window_params = [{transform_indices = @transform_0, window_bounds = array<i64: 256, 32>}, {transform_indices = @transform_1, window_bounds = array<i64: 32, 128>}, {transform_indices = @transform_2, window_bounds = array<i64: 256, 128>}]} {
    %c0_i32 = arith.constant 0 : i32
    %0 = arith.cmpi eq, %arg1, %c0_i32 : i32
    %1 = arith.extui %0 : i1 to i32
    %c0_i32_0 = arith.constant 0 : i32
    %2 = arith.cmpi ne, %1, %c0_i32_0 : i32
    scf.if %2 {
      %cst_10 = arith.constant 0.000000e+00 : f32
      %12 = vector.broadcast %cst_10 : f32 to vector<256x128xf32>
      %c0_11 = arith.constant 0 : index
      %c0_12 = arith.constant 0 : index
      %13 = vector.load %arg5[%c0_11, %c0_12] : memref<256x128xf32, #tpu.memory_space<vmem>>, vector<256x128xf32>
      tpu.vector_store %arg5[%c0_11, %c0_12], %12 {strides = array<i32>} : memref<256x128xf32, #tpu.memory_space<vmem>>, vector<256x128xf32>,
    } else {
    }
    %c0 = arith.constant 0 : index
    %c0_1 = arith.constant 0 : index
    %3 = vector.load %arg5[%c0, %c0_1] : memref<256x128xf32, #tpu.memory_space<vmem>>, vector<256x128xf32>
    %c0_2 = arith.constant 0 : index
    %c0_3 = arith.constant 0 : index
    %4 = vector.load %arg2[%c0_2, %c0_3] : memref<256x32xbf16, #tpu.memory_space<vmem>>, vector<256x32xbf16>
    %c0_4 = arith.constant 0 : index
    %c0_5 = arith.constant 0 : index
    %5 = vector.load %arg3[%c0_4, %c0_5] : memref<32x128xbf16, #tpu.memory_space<vmem>>, vector<32x128xbf16>
    %cst = arith.constant dense<0.000000e+00> : vector<256x128xf32>
    %6 = tpu.matmul %4, %5, %cst {dimension_numbers = #tpu.dot_dimension_numbers<[1], [0], [0], [1], [0, 0, 1, 1], [], []>} : vector<256x32xbf16>, vector<32x128xbf16>, vector<256x128xf32> -> vector<256x128xf32>
    %7 = arith.addf %3, %6 : vector<256x128xf32>
    %c0_6 = arith.constant 0 : index
    %c0_7 = arith.constant 0 : index
    %8 = vector.load %arg5[%c0_6, %c0_7] : memref<256x128xf32, #tpu.memory_space<vmem>>, vector<256x128xf32>
    tpu.vector_store %arg5[%c0_6, %c0_7], %7 {strides = array<i32>} : memref<256x128xf32, #tpu.memory_space<vmem>>, vector<256x128xf32>,
    %c0_i32_8 = arith.constant 0 : i32
    %9 = arith.cmpi eq, %arg1, %c0_i32_8 : i32
    %10 = arith.extui %9 : i1 to i32
    %c0_i32_9 = arith.constant 0 : i32
    %11 = arith.cmpi ne, %10, %c0_i32_9 : i32
    scf.if %11 {
      %c0_10 = arith.constant 0 : index
      %c0_11 = arith.constant 0 : index
      %12 = vector.load %arg5[%c0_10, %c0_11] : memref<256x128xf32, #tpu.memory_space<vmem>>, vector<256x128xf32>
      %13 = arith.truncf %12 : vector<256x128xf32> to vector<256x128xbf16>
      %c0_12 = arith.constant 0 : index
      %c0_13 = arith.constant 0 : index
      %14 = vector.load %arg4[%c0_12, %c0_13] : memref<256x128xbf16, #tpu.memory_space<vmem>>, vector<256x128xbf16>
      tpu.vector_store %arg4[%c0_12, %c0_13], %13 {strides = array<i32>} : memref<256x128xbf16, #tpu.memory_space<vmem>>, vector<256x128xbf16>,
    } else {
    }
    return
  }
  func.func @transform_0(%arg0: i32, %arg1: i32) -> (i32, i32) {
    %c0_i32 = arith.constant 0 : i32
    return %arg0, %arg1 : i32, i32
  }
  func.func @transform_1(%arg0: i32, %arg1: i32) -> (i32, i32) {
    %c0_i32 = arith.constant 0 : i32
    %c0_i32_0 = arith.constant 0 : i32
    return %arg1, %c0_i32 : i32, i32
  }
  func.func @transform_2(%arg0: i32, %arg1: i32) -> (i32, i32) {
    %c0_i32 = arith.constant 0 : i32
    %c0_i32_0 = arith.constant 0 : i32
    return %arg0, %c0_i32 : i32, i32
  }
}

</mosaic_0001>

<llo_original>
// kernel: tpu_custom_call.1
$region0: #{tpu_custom_call.1}
  #allocation0 [shape = 'u32[]', space=smem, size = 0x4, offset = 0x4, fixed_abs, tag = 'smem constant byte address 0x4 - core index']
  #allocation1 [shape = 'u32[72,128]{1,0:T(1,128)}', space=vmem, size = 0x9000, scoped, tag = 'internal scratch']
  #allocation2 [shape = 'f32[256,128]{1,0:T(8,128)}', space=vmem, size = 0x20000, scoped, tag = 'scratch operand']
  %s0 = inlined_call_operand.vmem [shape: bf16[256,32], index: 0, kind: input, shape index: {}]
  %s1 = inlined_call_operand.vmem [shape: bf16[32,128], index: 1, kind: input, shape index: {}]
  %s2 = inlined_call_operand.hbm [shape: bf16[256,128], index: 2, kind: output, shape index: {}]
  %s3 = sld [smem:[#allocation0]]
  $region26: #{tpu_custom_call.1} parent=0
    _
  %s5 = ssub.s32 1, %s3
  %s6 = scalar_select 0, %s5, %s3
  $region1: #{tpu_custom_call.1} parent=0
    #allocation3 [shape = 'u8[65536]{0}', space=vmem, size = 0x10000, scoped, tag = 'output window, operand 0, single buffered']
    #allocation4 [shape = 's32[1]{0}', space=sflag, size = 0x4, scoped, tag = 'scoped memory for tpu_custom_call.1']
    %7 = vsyncpa [#allocation4], 0
    // Predicated region
    $region2: #{tpu_custom_call.1} parent=1 // pred_check
      _
    $region3: #{tpu_custom_call.1} parent=1 // pred_check_branch
      %9 = sbr.rel (0) target = $region5
    $region4: #{tpu_custom_call.1} parent=1 // pred_region
      _
    $region5: #{tpu_custom_call.1} parent=1 // pred_fallthru
      _
    // Predicated region
    $region6: #{tpu_custom_call.1} parent=1 // pred_check
      _
    $region7: #{tpu_custom_call.1} parent=1 // pred_check_branch
      %11 = sbr.rel (0) target = $region9
    $region8: #{tpu_custom_call.1} parent=1 // pred_region
      _
    $region9: #{tpu_custom_call.1} parent=1 // pred_fallthru
      _
    %p13 = scmp.eq.s32.totalorder 0, 0
    // Predicated region
    $region10: #{tpu_custom_call.1} parent=1 // pred_check
      %p14 = pneg %p13
    $region11: #{tpu_custom_call.1} parent=1 // pred_check_branch
      %16 = sbr.rel (%p14) target = $region13
    $region12: #{tpu_custom_call.1} parent=1 // pred_region
      %17 = vst [vmem:[#allocation2] sm:$0xff] 0.0
      %18 = vst [vmem:[#allocation2 + $0x8] sm:$0xff] 0.0
      %19 = vst [vmem:[#allocation2 + $0x10] sm:$0xff] 0.0
      %20 = vst [vmem:[#allocation2 + $0x18] sm:$0xff] 0.0
      %21 = vst [vmem:[#allocation2 + $0x20] sm:$0xff] 0.0
      %22 = vst [vmem:[#allocation2 + $0x28] sm:$0xff] 0.0
      %23 = vst [vmem:[#allocation2 + $0x30] sm:$0xff] 0.0
      %24 = vst [vmem:[#allocation2 + $0x38] sm:$0xff] 0.0
      %25 = vst [vmem:[#allocation2 + $0x40] sm:$0xff] 0.0
      %26 = vst [vmem:[#allocation2 + $0x48] sm:$0xff] 0.0
      %27 = vst [vmem:[#allocation2 + $0x50] sm:$0xff] 0.0
      %28 = vst [vmem:[#allocation2 + $0x58] sm:$0xff] 0.0
      %29 = vst [vmem:[#allocation2 + $0x60] sm:$0xff] 0.0
      %30 = vst [vmem:[#allocation2 + $0x68] sm:$0xff] 0.0
      %31 = vst [vmem:[#allocation2 + $0x70] sm:$0xff] 0.0
      %32 = vst [vmem:[#allocation2 + $0x78] sm:$0xff] 0.0
      %33 = vst [vmem:[#allocation2 + $0x80] sm:$0xff] 0.0
      %34 = vst [vmem:[#allocation2 + $0x88] sm:$0xff] 0.0
      %35 = vst [vmem:[#allocation2 + $0x90] sm:$0xff] 0.0
      %36 = vst [vmem:[#allocation2 + $0x98] sm:$0xff] 0.0
      %37 = vst [vmem:[#allocation2 + $0xa0] sm:$0xff] 0.0
      %38 = vst [vmem:[#allocation2 + $0xa8] sm:$0xff] 0.0
      %39 = vst [vmem:[#allocation2 + $0xb0] sm:$0xff] 0.0
      %40 = vst [vmem:[#allocation2 + $0xb8] sm:$0xff] 0.0
      %41 = vst [vmem:[#allocation2 + $0xc0] sm:$0xff] 0.0
      %42 = vst [vmem:[#allocation2 + $0xc8] sm:$0xff] 0.0
      %43 = vst [vmem:[#allocation2 + $0xd0] sm:$0xff] 0.0
      %44 = vst [vmem:[#allocation2 + $0xd8] sm:$0xff] 0.0
      %45 = vst [vmem:[#allocation2 + $0xe0] sm:$0xff] 0.0
      %46 = vst [vmem:[#allocation2 + $0xe8] sm:$0xff] 0.0
      %47 = vst [vmem:[#allocation2 + $0xf0] sm:$0xff] 0.0
      %48 = vst [vmem:[#allocation2 + $0xf8] sm:$0xff] 0.0
    $region13: #{tpu_custom_call.1} parent=1 // pred_fallthru
      _
    %v49 = vld [vmem:[#allocation2] sm:$0xff]
    %v50 = vld [vmem:[#allocation2 + $0x8] sm:$0xff]
    %v51 = vld [vmem:[#allocation2 + $0x10] sm:$0xff]
    %v52 = vld [vmem:[#allocation2 + $0x18] sm:$0xff]
    %v53 = vld [vmem:[#allocation2 + $0x20] sm:$0xff]
    %v54 = vld [vmem:[#allocation2 + $0x28] sm:$0xff]
    %v55 = vld [vmem:[#allocation2 + $0x30] sm:$0xff]
    %v56 = vld [vmem:[#allocation2 + $0x38] sm:$0xff]
    %v57 = vld [vmem:[#allocation2 + $0x40] sm:$0xff]
    %v58 = vld [vmem:[#allocation2 + $0x48] sm:$0xff]
    %v59 = vld [vmem:[#allocation2 + $0x50] sm:$0xff]
    %v60 = vld [vmem:[#allocation2 + $0x58] sm:$0xff]
    %v61 = vld [vmem:[#allocation2 + $0x60] sm:$0xff]
    %v62 = vld [vmem:[#allocation2 + $0x68] sm:$0xff]
    %v63 = vld [vmem:[#allocation2 + $0x70] sm:$0xff]
    %v64 = vld [vmem:[#allocation2 + $0x78] sm:$0xff]
    %v65 = vld [vmem:[#allocation2 + $0x80] sm:$0xff]
    %v66 = vld [vmem:[#allocation2 + $0x88] sm:$0xff]
    %v67 = vld [vmem:[#allocation2 + $0x90] sm:$0xff]
    %v68 = vld [vmem:[#allocation2 + $0x98] sm:$0xff]
    %v69 = vld [vmem:[#allocation2 + $0xa0] sm:$0xff]
    %v70 = vld [vmem:[#allocation2 + $0xa8] sm:$0xff]
    %v71 = vld [vmem:[#allocation2 + $0xb0] sm:$0xff]
    %v72 = vld [vmem:[#allocation2 + $0xb8] sm:$0xff]
    %v73 = vld [vmem:[#allocation2 + $0xc0] sm:$0xff]
    %v74 = vld [vmem:[#allocation2 + $0xc8] sm:$0xff]
    %v75 = vld [vmem:[#allocation2 + $0xd0] sm:$0xff]
    %v76 = vld [vmem:[#allocation2 + $0xd8] sm:$0xff]
    %v77 = vld [vmem:[#allocation2 + $0xe0] sm:$0xff]
    %v78 = vld [vmem:[#allocation2 + $0xe8] sm:$0xff]
    %v79 = vld [vmem:[#allocation2 + $0xf0] sm:$0xff]
    %v80 = vld [vmem:[#allocation2 + $0xf8] sm:$0xff]
    %v81 = vld [vmem:[%s0] sm:$0xf]
    %v82 = vld [vmem:[%s0 + $0x4] sm:$0xf]
    %v83 = vld [vmem:[%s0 + $0x8] sm:$0xf]
    %v84 = vld [vmem:[%s0 + $0xc] sm:$0xf]
    %v85 = vld [vmem:[%s0 + $0x10] sm:$0xf]
    %v86 = vld [vmem:[%s0 + $0x14] sm:$0xf]
    %v87 = vld [vmem:[%s0 + $0x18] sm:$0xf]
    %v88 = vld [vmem:[%s0 + $0x1c] sm:$0xf]
    %v89 = vld [vmem:[%s0 + $0x20] sm:$0xf]
    %v90 = vld [vmem:[%s0 + $0x24] sm:$0xf]
    %v91 = vld [vmem:[%s0 + $0x28] sm:$0xf]
    %v92 = vld [vmem:[%s0 + $0x2c] sm:$0xf]
    %v93 = vld [vmem:[%s0 + $0x30] sm:$0xf]
    %v94 = vld [vmem:[%s0 + $0x34] sm:$0xf]
    %v95 = vld [vmem:[%s0 + $0x38] sm:$0xf]
    %v96 = vld [vmem:[%s0 + $0x3c] sm:$0xf]
    %v97 = vld [vmem:[%s0 + $0x40] sm:$0xf]
    %v98 = vld [vmem:[%s0 + $0x44] sm:$0xf]
    %v99 = vld [vmem:[%s0 + $0x48] sm:$0xf]
    %v100 = vld [vmem:[%s0 + $0x4c] sm:$0xf]
    %v101 = vld [vmem:[%s0 + $0x50] sm:$0xf]
    %v102 = vld [vmem:[%s0 + $0x54] sm:$0xf]
    %v103 = vld [vmem:[%s0 + $0x58] sm:$0xf]
    %v104 = vld [vmem:[%s0 + $0x5c] sm:$0xf]
    %v105 = vld [vmem:[%s0 + $0x60] sm:$0xf]
    %v106 = vld [vmem:[%s0 + $0x64] sm:$0xf]
    %v107 = vld [vmem:[%s0 + $0x68] sm:$0xf]
    %v108 = vld [vmem:[%s0 + $0x6c] sm:$0xf]
    %v109 = vld [vmem:[%s0 + $0x70] sm:$0xf]
    %v110 = vld [vmem:[%s0 + $0x74] sm:$0xf]
    %v111 = vld [vmem:[%s0 + $0x78] sm:$0xf]
    %v112 = vld [vmem:[%s0 + $0x7c] sm:$0xf]
    %v113 = vld [vmem:[%s1] sm:$0xf]
    %v114 = vld [vmem:[%s1 + $0x4] sm:$0xf]
    %v115 = vld [vmem:[%s1 + $0x8] sm:$0xf]
    %v116 = vld [vmem:[%s1 + $0xc] sm:$0xf]
    %v149 = vunpack.c.l.b16 %v81
    %v150 = vunpack.c.l.b16 %v82
    %v151 = vunpack.c.l.b16 %v83
    %v152 = vunpack.c.l.b16 %v84
    %v153 = vunpack.c.l.b16 %v85
    %v154 = vunpack.c.l.b16 %v86
    %v155 = vunpack.c.l.b16 %v87
    %v156 = vunpack.c.l.b16 %v88
    %v157 = vunpack.c.l.b16 %v89
    %v158 = vunpack.c.l.b16 %v90
    %v159 = vunpack.c.l.b16 %v91
    %v160 = vunpack.c.l.b16 %v92
    %v161 = vunpack.c.l.b16 %v93
    %v162 = vunpack.c.l.b16 %v94
    %v163 = vunpack.c.l.b16 %v95
    %v164 = vunpack.c.l.b16 %v96
    %v165 = vunpack.c.l.b16 %v97
    %v166 = vunpack.c.l.b16 %v98
    %v167 = vunpack.c.l.b16 %v99
    %v168 = vunpack.c.l.b16 %v100
    %v169 = vunpack.c.l.b16 %v101
    %v170 = vunpack.c.l.b16 %v102
    %v171 = vunpack.c.l.b16 %v103
    %v172 = vunpack.c.l.b16 %v104
    %v173 = vunpack.c.l.b16 %v105
    %v174 = vunpack.c.l.b16 %v106
    %v175 = vunpack.c.l.b16 %v107
    %v176 = vunpack.c.l.b16 %v108
    %v177 = vunpack.c.l.b16 %v109
    %v178 = vunpack.c.l.b16 %v110
    %v179 = vunpack.c.l.b16 %v111
    %v180 = vunpack.c.l.b16 %v112
    %v181 = vpack.c.b16 %v150, %v149
    %v182 = vpack.c.b16 %v152, %v151
    %v183 = vpack.c.b16 %v154, %v153
    %v184 = vpack.c.b16 %v156, %v155
    %v185 = vpack.c.b16 %v158, %v157
    %v186 = vpack.c.b16 %v160, %v159
    %v187 = vpack.c.b16 %v162, %v161
    %v188 = vpack.c.b16 %v164, %v163
    %v189 = vpack.c.b16 %v166, %v165
    %v190 = vpack.c.b16 %v168, %v167
    %v191 = vpack.c.b16 %v170, %v169
    %v192 = vpack.c.b16 %v172, %v171
    %v193 = vpack.c.b16 %v174, %v173
    %v194 = vpack.c.b16 %v176, %v175
    %v195 = vpack.c.b16 %v178, %v177
    %v196 = vpack.c.b16 %v180, %v179
    %v201 = vunpack.c.l.b16 %v113
    %v202 = vunpack.c.l.b16 %v114
    %v203 = vunpack.c.l.b16 %v115
    %v204 = vunpack.c.l.b16 %v116
    %v205 = vpack.c.b16 %v202, %v201
    %v206 = vpack.c.b16 %v204, %v203
    %vm209 = vcmask 261120
    %v211 = vsel %vm209, %v181, 0
    %v214 = vsel %vm209, %v182, 0
    %v217 = vsel %vm209, %v183, 0
    %v220 = vsel %vm209, %v184, 0
    %v223 = vsel %vm209, %v185, 0
    %v226 = vsel %vm209, %v186, 0
    %v229 = vsel %vm209, %v187, 0
    %v232 = vsel %vm209, %v188, 0
    %v235 = vsel %vm209, %v189, 0
    %v238 = vsel %vm209, %v190, 0
    %v241 = vsel %vm209, %v191, 0
    %v244 = vsel %vm209, %v192, 0
    %v247 = vsel %vm209, %v193, 0
    %v250 = vsel %vm209, %v194, 0
    %v253 = vsel %vm209, %v195, 0
    %v256 = vsel %vm209, %v196, 0
    %258 = vmatpush.bf16.msra.mxu0 0
    %259 = vmatpush.bf16.msra.mxu0 0
    %260 = vmatpush.bf16.msra.mxu0 0
    %261 = vmatpush.bf16.msra.mxu0 0
    %262 = vmatpush.bf16.msra.mxu0 0
    %263 = vmatpush.bf16.msra.mxu0 0
    %264 = vmatpush.bf16.msra.mxu0 %v206
    %265 = vmatpush.bf16.msra.mxu0 %v205
    %266 = vmatmul.bf16.gmra.mxu0 %v211
    %v267 = vpop.f32.mrf.mxu0
    %v268 = vadd.f32 0.0, %v267
    %v269 = vpop.f32.mrf.mxu0
    %v270 = vadd.f32 0.0, %v269
    %271 = vmatmul.bf16.gmra.mxu0 %v214
    %v272 = vpop.f32.mrf.mxu0
    %v273 = vadd.f32 0.0, %v272
    %v274 = vpop.f32.mrf.mxu0
    %v275 = vadd.f32 0.0, %v274
    %276 = vmatmul.bf16.gmra.mxu0 %v217
    %v277 = vpop.f32.mrf.mxu0
    %v278 = vadd.f32 0.0, %v277
    %v279 = vpop.f32.mrf.mxu0
    %v280 = vadd.f32 0.0, %v279
    %281 = vmatmul.bf16.gmra.mxu0 %v220
    %v282 = vpop.f32.mrf.mxu0
    %v283 = vadd.f32 0.0, %v282
    %v284 = vpop.f32.mrf.mxu0
    %v285 = vadd.f32 0.0, %v284
    %286 = vmatmul.bf16.gmra.mxu0 %v223
    %v287 = vpop.f32.mrf.mxu0
    %v288 = vadd.f32 0.0, %v287
    %v289 = vpop.f32.mrf.mxu0
    %v290 = vadd.f32 0.0, %v289
    %291 = vmatmul.bf16.gmra.mxu0 %v226
    %v292 = vpop.f32.mrf.mxu0
    %v293 = vadd.f32 0.0, %v292
    %v294 = vpop.f32.mrf.mxu0
    %v295 = vadd.f32 0.0, %v294
    %296 = vmatmul.bf16.gmra.mxu0 %v229
    %v297 = vpop.f32.mrf.mxu0
    %v298 = vadd.f32 0.0, %v297
    %v299 = vpop.f32.mrf.mxu0
    %v300 = vadd.f32 0.0, %v299
    %301 = vmatmul.bf16.gmra.mxu0 %v232
    %v302 = vpop.f32.mrf.mxu0
    %v303 = vadd.f32 0.0, %v302
    %v304 = vpop.f32.mrf.mxu0
    %v305 = vadd.f32 0.0, %v304
    %306 = vmatmul.bf16.gmra.mxu0 %v235
    %v307 = vpop.f32.mrf.mxu0
    %v308 = vadd.f32 0.0, %v307
    %v309 = vpop.f32.mrf.mxu0
    %v310 = vadd.f32 0.0, %v309
    %311 = vmatmul.bf16.gmra.mxu0 %v238
    %v312 = vpop.f32.mrf.mxu0
    %v313 = vadd.f32 0.0, %v312
    %v314 = vpop.f32.mrf.mxu0
    %v315 = vadd.f32 0.0, %v314
    %316 = vmatmul.bf16.gmra.mxu0 %v241
    %v317 = vpop.f32.mrf.mxu0
    %v318 = vadd.f32 0.0, %v317
    %v319 = vpop.f32.mrf.mxu0
    %v320 = vadd.f32 0.0, %v319
    %321 = vmatmul.bf16.gmra.mxu0 %v244
    %v322 = vpop.f32.mrf.mxu0
    %v323 = vadd.f32 0.0, %v322
    %v324 = vpop.f32.mrf.mxu0
    %v325 = vadd.f32 0.0, %v324
    %326 = vmatmul.bf16.gmra.mxu0 %v247
    %v327 = vpop.f32.mrf.mxu0
    %v328 = vadd.f32 0.0, %v327
    %v329 = vpop.f32.mrf.mxu0
    %v330 = vadd.f32 0.0, %v329
    %331 = vmatmul.bf16.gmra.mxu0 %v250
    %v332 = vpop.f32.mrf.mxu0
    %v333 = vadd.f32 0.0, %v332
    %v334 = vpop.f32.mrf.mxu0
    %v335 = vadd.f32 0.0, %v334
    %336 = vmatmul.bf16.gmra.mxu0 %v253
    %v337 = vpop.f32.mrf.mxu0
    %v338 = vadd.f32 0.0, %v337
    %v339 = vpop.f32.mrf.mxu0
    %v340 = vadd.f32 0.0, %v339
    %341 = vmatmul.bf16.gmra.mxu0 %v256
    %v342 = vpop.f32.mrf.mxu0
    %v343 = vadd.f32 0.0, %v342
    %v344 = vpop.f32.mrf.mxu0
    %v345 = vadd.f32 0.0, %v344
    %346 = vdwg.mxu0
    %v347 = vadd.f32 %v49, %v268
    %v348 = vadd.f32 %v50, %v270
    %v349 = vadd.f32 %v51, %v273
    %v350 = vadd.f32 %v52, %v275
    %v351 = vadd.f32 %v53, %v278
    %v352 = vadd.f32 %v54, %v280
    %v353 = vadd.f32 %v55, %v283
    %v354 = vadd.f32 %v56, %v285
    %v355 = vadd.f32 %v57, %v288
    %v356 = vadd.f32 %v58, %v290
    %v357 = vadd.f32 %v59, %v293
    %v358 = vadd.f32 %v60, %v295
    %v359 = vadd.f32 %v61, %v298
    %v360 = vadd.f32 %v62, %v300
    %v361 = vadd.f32 %v63, %v303
    %v362 = vadd.f32 %v64, %v305
    %v363 = vadd.f32 %v65, %v308
    %v364 = vadd.f32 %v66, %v310
    %v365 = vadd.f32 %v67, %v313
    %v366 = vadd.f32 %v68, %v315
    %v367 = vadd.f32 %v69, %v318
    %v368 = vadd.f32 %v70, %v320
    %v369 = vadd.f32 %v71, %v323
    %v370 = vadd.f32 %v72, %v325
    %v371 = vadd.f32 %v73, %v328
    %v372 = vadd.f32 %v74, %v330
    %v373 = vadd.f32 %v75, %v333
    %v374 = vadd.f32 %v76, %v335
    %v375 = vadd.f32 %v77, %v338
    %v376 = vadd.f32 %v78, %v340
    %v377 = vadd.f32 %v79, %v343
    %v378 = vadd.f32 %v80, %v345
    %379 = vst [vmem:[#allocation2] sm:$0xff] %v347
    %380 = vst [vmem:[#allocation2 + $0x8] sm:$0xff] %v348
    %381 = vst [vmem:[#allocation2 + $0x10] sm:$0xff] %v349
    %382 = vst [vmem:[#allocation2 + $0x18] sm:$0xff] %v350
    %383 = vst [vmem:[#allocation2 + $0x20] sm:$0xff] %v351
    %384 = vst [vmem:[#allocation2 + $0x28] sm:$0xff] %v352
    %385 = vst [vmem:[#allocation2 + $0x30] sm:$0xff] %v353
    %386 = vst [vmem:[#allocation2 + $0x38] sm:$0xff] %v354
    %387 = vst [vmem:[#allocation2 + $0x40] sm:$0xff] %v355
    %388 = vst [vmem:[#allocation2 + $0x48] sm:$0xff] %v356
    %389 = vst [vmem:[#allocation2 + $0x50] sm:$0xff] %v357
    %390 = vst [vmem:[#allocation2 + $0x58] sm:$0xff] %v358
    %391 = vst [vmem:[#allocation2 + $0x60] sm:$0xff] %v359
    %392 = vst [vmem:[#allocation2 + $0x68] sm:$0xff] %v360
    %393 = vst [vmem:[#allocation2 + $0x70] sm:$0xff] %v361
    %394 = vst [vmem:[#allocation2 + $0x78] sm:$0xff] %v362
    %395 = vst [vmem:[#allocation2 + $0x80] sm:$0xff] %v363
    %396 = vst [vmem:[#allocation2 + $0x88] sm:$0xff] %v364
    %397 = vst [vmem:[#allocation2 + $0x90] sm:$0xff] %v365
    %398 = vst [vmem:[#allocation2 + $0x98] sm:$0xff] %v366
    %399 = vst [vmem:[#allocation2 + $0xa0] sm:$0xff] %v367
    %400 = vst [vmem:[#allocation2 + $0xa8] sm:$0xff] %v368
    %401 = vst [vmem:[#allocation2 + $0xb0] sm:$0xff] %v369
    %402 = vst [vmem:[#allocation2 + $0xb8] sm:$0xff] %v370
    %403 = vst [vmem:[#allocation2 + $0xc0] sm:$0xff] %v371
    %404 = vst [vmem:[#allocation2 + $0xc8] sm:$0xff] %v372
    %405 = vst [vmem:[#allocation2 + $0xd0] sm:$0xff] %v373
    %406 = vst [vmem:[#allocation2 + $0xd8] sm:$0xff] %v374
    %407 = vst [vmem:[#allocation2 + $0xe0] sm:$0xff] %v375
    %408 = vst [vmem:[#allocation2 + $0xe8] sm:$0xff] %v376
    %409 = vst [vmem:[#allocation2 + $0xf0] sm:$0xff] %v377
    %410 = vst [vmem:[#allocation2 + $0xf8] sm:$0xff] %v378
    // Predicated region
    $region14: #{tpu_custom_call.1} parent=1 // pred_check
      %p411 = pneg %p13
    $region15: #{tpu_custom_call.1} parent=1 // pred_check_branch
      %413 = sbr.rel (%p411) target = $region17
    $region16: #{tpu_custom_call.1} parent=1 // pred_region
      %v414 = vld [vmem:[#allocation2] sm:$0xff]
      %v415 = vld [vmem:[#allocation2 + $0x8] sm:$0xff]
      %v416 = vld [vmem:[#allocation2 + $0x10] sm:$0xff]
      %v417 = vld [vmem:[#allocation2 + $0x18] sm:$0xff]
      %v418 = vld [vmem:[#allocation2 + $0x20] sm:$0xff]
      %v419 = vld [vmem:[#allocation2 + $0x28] sm:$0xff]
      %v420 = vld [vmem:[#allocation2 + $0x30] sm:$0xff]
      %v421 = vld [vmem:[#allocation2 + $0x38] sm:$0xff]
      %v422 = vld [vmem:[#allocation2 + $0x40] sm:$0xff]
      %v423 = vld [vmem:[#allocation2 + $0x48] sm:$0xff]
      %v424 = vld [vmem:[#allocation2 + $0x50] sm:$0xff]
      %v425 = vld [vmem:[#allocation2 + $0x58] sm:$0xff]
      %v426 = vld [vmem:[#allocation2 + $0x60] sm:$0xff]
      %v427 = vld [vmem:[#allocation2 + $0x68] sm:$0xff]
      %v428 = vld [vmem:[#allocation2 + $0x70] sm:$0xff]
      %v429 = vld [vmem:[#allocation2 + $0x78] sm:$0xff]
      %v430 = vld [vmem:[#allocation2 + $0x80] sm:$0xff]
      %v431 = vld [vmem:[#allocation2 + $0x88] sm:$0xff]
      %v432 = vld [vmem:[#allocation2 + $0x90] sm:$0xff]
      %v433 = vld [vmem:[#allocation2 + $0x98] sm:$0xff]
      %v434 = vld [vmem:[#allocation2 + $0xa0] sm:$0xff]
      %v435 = vld [vmem:[#allocation2 + $0xa8] sm:$0xff]
      %v436 = vld [vmem:[#allocation2 + $0xb0] sm:$0xff]
      %v437 = vld [vmem:[#allocation2 + $0xb8] sm:$0xff]
      %v438 = vld [vmem:[#allocation2 + $0xc0] sm:$0xff]
      %v439 = vld [vmem:[#allocation2 + $0xc8] sm:$0xff]
      %v440 = vld [vmem:[#allocation2 + $0xd0] sm:$0xff]
      %v441 = vld [vmem:[#allocation2 + $0xd8] sm:$0xff]
      %v442 = vld [vmem:[#allocation2 + $0xe0] sm:$0xff]
      %v443 = vld [vmem:[#allocation2 + $0xe8] sm:$0xff]
      %v444 = vld [vmem:[#allocation2 + $0xf0] sm:$0xff]
      %v445 = vld [vmem:[#allocation2 + $0xf8] sm:$0xff]
      %v446 = vpack.c.bf16 %v414, %v414
      %v447 = vpack.c.bf16 %v415, %v415
      %v448 = vpack.c.bf16 %v416, %v416
      %v449 = vpack.c.bf16 %v417, %v417
      %v450 = vpack.c.bf16 %v418, %v418
      %v451 = vpack.c.bf16 %v419, %v419
      %v452 = vpack.c.bf16 %v420, %v420
      %v453 = vpack.c.bf16 %v421, %v421
      %v454 = vpack.c.bf16 %v422, %v422
      %v455 = vpack.c.bf16 %v423, %v423
      %v456 = vpack.c.bf16 %v424, %v424
      %v457 = vpack.c.bf16 %v425, %v425
      %v458 = vpack.c.bf16 %v426, %v426
      %v459 = vpack.c.bf16 %v427, %v427
      %v460 = vpack.c.bf16 %v428, %v428
      %v461 = vpack.c.bf16 %v429, %v429
      %v462 = vpack.c.bf16 %v430, %v430
      %v463 = vpack.c.bf16 %v431, %v431
      %v464 = vpack.c.bf16 %v432, %v432
      %v465 = vpack.c.bf16 %v433, %v433
      %v466 = vpack.c.bf16 %v434, %v434
      %v467 = vpack.c.bf16 %v435, %v435
      %v468 = vpack.c.bf16 %v436, %v436
      %v469 = vpack.c.bf16 %v437, %v437
      %v470 = vpack.c.bf16 %v438, %v438
      %v471 = vpack.c.bf16 %v439, %v439
      %v472 = vpack.c.bf16 %v440, %v440
      %v473 = vpack.c.bf16 %v441, %v441
      %v474 = vpack.c.bf16 %v442, %v442
      %v475 = vpack.c.bf16 %v443, %v443
      %v476 = vpack.c.bf16 %v444, %v444
      %v477 = vpack.c.bf16 %v445, %v445
      %478 = vst [vmem:[#allocation3] sm:$0xf] %v446
      %479 = vst [vmem:[#allocation3 + $0x4] sm:$0xf] %v447
      %480 = vst [vmem:[#allocation3 + $0x8] sm:$0xf] %v448
      %481 = vst [vmem:[#allocation3 + $0xc] sm:$0xf] %v449
      %482 = vst [vmem:[#allocation3 + $0x10] sm:$0xf] %v450
      %483 = vst [vmem:[#allocation3 + $0x14] sm:$0xf] %v451
      %484 = vst [vmem:[#allocation3 + $0x18] sm:$0xf] %v452
      %485 = vst [vmem:[#allocation3 + $0x1c] sm:$0xf] %v453
      %486 = vst [vmem:[#allocation3 + $0x20] sm:$0xf] %v454
      %487 = vst [vmem:[#allocation3 + $0x24] sm:$0xf] %v455
      %488 = vst [vmem:[#allocation3 + $0x28] sm:$0xf] %v456
      %489 = vst [vmem:[#allocation3 + $0x2c] sm:$0xf] %v457
      %490 = vst [vmem:[#allocation3 + $0x30] sm:$0xf] %v458
      %491 = vst [vmem:[#allocation3 + $0x34] sm:$0xf] %v459
      %492 = vst [vmem:[#allocation3 + $0x38] sm:$0xf] %v460
      %493 = vst [vmem:[#allocation3 + $0x3c] sm:$0xf] %v461
      %494 = vst [vmem:[#allocation3 + $0x40] sm:$0xf] %v462
      %495 = vst [vmem:[#allocation3 + $0x44] sm:$0xf] %v463
      %496 = vst [vmem:[#allocation3 + $0x48] sm:$0xf] %v464
      %497 = vst [vmem:[#allocation3 + $0x4c] sm:$0xf] %v465
      %498 = vst [vmem:[#allocation3 + $0x50] sm:$0xf] %v466
      %499 = vst [vmem:[#allocation3 + $0x54] sm:$0xf] %v467
      %500 = vst [vmem:[#allocation3 + $0x58] sm:$0xf] %v468
      %501 = vst [vmem:[#allocation3 + $0x5c] sm:$0xf] %v469
      %502 = vst [vmem:[#allocation3 + $0x60] sm:$0xf] %v470
      %503 = vst [vmem:[#allocation3 + $0x64] sm:$0xf] %v471
      %504 = vst [vmem:[#allocation3 + $0x68] sm:$0xf] %v472
      %505 = vst [vmem:[#allocation3 + $0x6c] sm:$0xf] %v473
      %506 = vst [vmem:[#allocation3 + $0x70] sm:$0xf] %v474
      %507 = vst [vmem:[#allocation3 + $0x74] sm:$0xf] %v475
      %508 = vst [vmem:[#allocation3 + $0x78] sm:$0xf] %v476
      %509 = vst [vmem:[#allocation3 + $0x7c] sm:$0xf] %v477
    $region17: #{tpu_custom_call.1} parent=1 // pred_fallthru
      _
    // Predicated region
    $region18: #{tpu_custom_call.1} parent=1 // pred_check
      _
    $region19: #{tpu_custom_call.1} parent=1 // pred_check_branch
      %511 = sbr.rel (0) target = $region21
    $region20: #{tpu_custom_call.1} parent=1 // pred_region
      %513 = vsyncadd [#allocation4], 0
      %s514 = sshll.u32 [#allocation3], 4
      %s515 = int_to_ptr.vmem [resolvable:$true] %s514
      %s516 = sshll.u32 %s2, 4
      %s517 = int_to_ptr.hbm [resolvable:$true] %s516
      %522 = dma.vmem_to_hbm [thread:$0]  %s515, 2048, %s517, [#allocation4], 64, 64, 4
    $region21: #{tpu_custom_call.1} parent=1 // pred_fallthru
      _
    // Predicated region
    $region22: #{tpu_custom_call.1} parent=1 // pred_check
      _
    $region23: #{tpu_custom_call.1} parent=1 // pred_check_branch
      %524 = sbr.rel (0) target = $region25
    $region24: #{tpu_custom_call.1} parent=1 // pred_region
      %526 = dma.done [#allocation4], 2048
    $region25: #{tpu_custom_call.1} parent=1 // pred_fallthru
      _
    %527 = vsyncpa [#allocation4], 1

</llo_original>
